<compile_context>
chip_gen: v6e
topology: v6e:2x2x1
jax: 0.10.0
libtpu: 0.0.40
codegen_flags: <defaults>
</compile_context>

<pallas_src>
import jax
import jax.numpy as jnp
from jax.experimental import pallas as pl
from jax.experimental.pallas import tpu as pltpu

D = 768          # fixed by the module (nn.Linear(768, 1))
B = 8            # small example batch
S = 16           # small example sequence length
OUT_LANES = 128  # packed output tile: lane0=logits, lane1=rel, lane2(row0)=loss


def cross_encoder_kernel(hidden_ref, mask_ref, w_ref, labels_ref, b_ref, out_ref):
    # Inputs arrive in their native dtype (bf16 hidden states); widen on the VPU.
    h = hidden_ref[...].astype(jnp.float32)          # (B, S, D)
    m = mask_ref[...].astype(jnp.float32)            # (B, S, 1)
    w = w_ref[...]                                   # (1, D) f32
    y = labels_ref[...]                              # (B, 1) f32
    b = b_ref[0]                                     # scalar bias from SMEM

    # --- pooler('avg'): masked mean over the sequence axis; nan_to_num(0/0) -> 0
    masked_sum = jnp.sum(h * m, axis=1)                          # (B, D)
    count = jnp.sum(m, axis=1)                                   # (B, 1)
    embed = jnp.where(count > 0.0, masked_sum / count, 0.0)      # (B, D)

    # --- transform: Linear(768 -> 1) as VPU multiply + lane (XLU) reduction.
    #     (kept off the MXU: an N=1 matvec wastes the systolic array)
    logits = jnp.sum(embed * w, axis=-1, keepdims=True) + b      # (B, 1)

    # --- BCEWithLogitsLoss (mean reduction), numerically stable form:
    #     max(x, 0) - x*y + log(1 + exp(-|x|))
    per_elem = (jnp.maximum(logits, 0.0)
                - logits * y
                + jnp.log1p(jnp.exp(-jnp.abs(logits))))
    loss = jnp.mean(per_elem)                                    # scalar

    # --- relevance_score = -sigmoid(logits): exp on EUP, approx reciprocal on EUP
    rel = -pl.reciprocal(1.0 + jnp.exp(-logits), approx=True)    # (B, 1)

    # --- pack all results into one lane-dense tile -> single unmasked store
    col = jax.lax.broadcasted_iota(jnp.int32, (B, OUT_LANES), 1)
    packed = jnp.where(col == 0, logits,
             jnp.where(col == 1, rel,
             jnp.where(col == 2, loss, 0.0)))
    out_ref[...] = packed


def cross_encoder_forward(last_hidden_state, attention_mask, weight, bias, labels):
    """last_hidden_state: (B, S, D) (bf16 ok), attention_mask: (B, S),
    weight: (1, D) PyTorch Linear layout, bias: (1,), labels: (B,)."""
    mask3 = attention_mask.reshape(B, S, 1).astype(jnp.float32)
    labels2 = labels.reshape(B, 1).astype(jnp.float32)
    w = weight.reshape(1, D).astype(jnp.float32)
    b1 = bias.reshape(1).astype(jnp.float32)

    out = pl.pallas_call(
        cross_encoder_kernel,
        out_shape=jax.ShapeDtypeStruct((B, OUT_LANES), jnp.float32),
        in_specs=[
            pl.BlockSpec(memory_space=pltpu.MemorySpace.VMEM),   # hidden (bf16)
            pl.BlockSpec(memory_space=pltpu.MemorySpace.VMEM),   # mask
            pl.BlockSpec(memory_space=pltpu.MemorySpace.VMEM),   # weight
            pl.BlockSpec(memory_space=pltpu.MemorySpace.VMEM),   # labels
            pl.BlockSpec(memory_space=pltpu.MemorySpace.SMEM),   # bias (scalar)
        ],
        out_specs=pl.BlockSpec(memory_space=pltpu.MemorySpace.VMEM),
    )(last_hidden_state, mask3, w, labels2, b1)

    logits = out[:, 0]          # (B,)  == transform(embed).squeeze()
    rel = out[:, 1]             # (B,)  == relevance_score
    loss = out[0, 2]            # scalar BCE loss
    return loss, rel, logits


def _reference(last_hidden_state, attention_mask, weight, bias, labels):
    h = last_hidden_state.astype(jnp.float32)
    m = attention_mask.astype(jnp.float32)[:, :, None]
    masked_sum = jnp.sum(h * m, axis=1)
    count = jnp.sum(m, axis=1)
    embed = jnp.where(count > 0.0, masked_sum / count, 0.0)          # avg pool
    logits = embed @ weight.T + bias                                 # (B, 1)
    x = logits.reshape(-1)
    y = labels.astype(jnp.float32)
    loss = jnp.mean(jnp.maximum(x, 0.0) - x * y
                    + jnp.log1p(jnp.exp(-jnp.abs(x))))
    rel = -jax.nn.sigmoid(x)
    return loss, rel, x


if __name__ == "__main__":
    key = jax.random.PRNGKey(0)
    k_h, k_w, k_lab, k_len = jax.random.split(key, 4)

    # Deterministic "parameters": Linear(768 -> 1) init per _init_weights
    # (weight ~ N(0, 0.02), bias = 0).
    weight = 0.02 * jax.random.normal(k_w, (1, D), dtype=jnp.float32)
    bias = jnp.zeros((1,), dtype=jnp.float32)

    # Stand-in for SciBERT last_hidden_state (external encoder) — kept in bf16.
    last_hidden_state = jax.random.normal(
        k_h, (B, S, D), dtype=jnp.float32).astype(jnp.bfloat16)

    # Attention mask: first len_i tokens valid per row (>= 1 valid token).
    lengths = 1 + jax.random.randint(k_len, (B,), 0, S)
    attention_mask = (jnp.arange(S)[None, :] < lengths[:, None]).astype(jnp.int32)

    labels = jax.random.bernoulli(k_lab, 0.5, (B,)).astype(jnp.float32)

    loss, rel, logits = cross_encoder_forward(
        last_hidden_state, attention_mask, weight, bias, labels)
    jax.block_until_ready((loss, rel, logits))

    loss_ref, rel_ref, logits_ref = _reference(
        last_hidden_state, attention_mask, weight, bias, labels)

    assert jnp.allclose(logits, logits_ref, rtol=1e-4, atol=1e-5), "logits mismatch"
    # rel uses the EUP approximate reciprocal -> slightly looser tolerance
    assert jnp.allclose(rel, rel_ref, rtol=5e-3, atol=5e-3), "relevance mismatch"
    assert jnp.allclose(loss, loss_ref, rtol=1e-4, atol=1e-4), "loss mismatch"

    print("KERNEL_OK")
</pallas_src>

<mosaic_0001>
module attributes {stable_mosaic.version = 11 : i64} {
  func.func @cross_encoder_kernel(%arg0: memref<8x16x768xbf16, #tpu.memory_space<vmem>>, %arg1: memref<8x16x1xf32, #tpu.memory_space<vmem>>, %arg2: memref<1x768xf32, #tpu.memory_space<vmem>>, %arg3: memref<8x1xf32, #tpu.memory_space<vmem>>, %arg4: memref<1xf32, #tpu.memory_space<smem>>, %arg5: memref<8x128xf32, #tpu.memory_space<vmem>>) attributes {dimension_semantics = [], scalar_prefetch = 0 : i64, scratch_operands = 0 : i64, tpu.core_type = #tpu.core_type<tc>} {
    %c0 = arith.constant 0 : index
    %c0_0 = arith.constant 0 : index
    %c0_1 = arith.constant 0 : index
    %0 = vector.load %arg0[%c0, %c0_0, %c0_1] : memref<8x16x768xbf16, #tpu.memory_space<vmem>>, vector<8x16x768xbf16>
    %1 = arith.extf %0 : vector<8x16x768xbf16> to vector<8x16x768xf32>
    %c0_2 = arith.constant 0 : index
    %c0_3 = arith.constant 0 : index
    %c0_4 = arith.constant 0 : index
    %2 = vector.load %arg1[%c0_2, %c0_3, %c0_4] : memref<8x16x1xf32, #tpu.memory_space<vmem>>, vector<8x16x1xf32>
    %c0_5 = arith.constant 0 : index
    %c0_6 = arith.constant 0 : index
    %3 = vector.load %arg2[%c0_5, %c0_6] : memref<1x768xf32, #tpu.memory_space<vmem>>, vector<1x768xf32>
    %c0_7 = arith.constant 0 : index
    %c0_8 = arith.constant 0 : index
    %4 = vector.load %arg3[%c0_7, %c0_8] : memref<8x1xf32, #tpu.memory_space<vmem>>, vector<8x1xf32>
    %c0_9 = arith.constant 0 : index
    %5 = memref.load %arg4[%c0_9] : memref<1xf32, #tpu.memory_space<smem>>
    %6 = vector.broadcast %2 : vector<8x16x1xf32> to vector<8x16x768xf32>
    %7 = arith.mulf %1, %6 : vector<8x16x768xf32>
    %cst = arith.constant dense<0.000000e+00> : vector<8x768xf32>
    %8 = vector.multi_reduction <add>, %7, %cst [1] : vector<8x16x768xf32> to vector<8x768xf32>
    %cst_10 = arith.constant dense<0.000000e+00> : vector<8x1xf32>
    %9 = vector.multi_reduction <add>, %2, %cst_10 [1] : vector<8x16x1xf32> to vector<8x1xf32>
    %cst_11 = arith.constant 0.000000e+00 : f32
    %10 = vector.broadcast %cst_11 : f32 to vector<8x1xf32>
    %11 = arith.cmpf ogt, %9, %10 : vector<8x1xf32>
    %12 = vector.broadcast %9 : vector<8x1xf32> to vector<8x768xf32>
    %13 = arith.divf %8, %12 : vector<8x768xf32>
    %cst_12 = arith.constant 0.000000e+00 : f32
    %14 = vector.shape_cast %11 : vector<8x1xi1> to vector<8x1xi1>
    %15 = vector.broadcast %14 : vector<8x1xi1> to vector<8x768xi1>
    %16 = vector.broadcast %cst_12 : f32 to vector<8x768xf32>
    %17 = arith.select %15, %13, %16 : vector<8x768xi1>, vector<8x768xf32>
    %18 = vector.broadcast %3 : vector<1x768xf32> to vector<8x768xf32>
    %19 = arith.mulf %17, %18 : vector<8x768xf32>
    %cst_13 = arith.constant dense<0.000000e+00> : vector<8xf32>
    %20 = vector.multi_reduction <add>, %19, %cst_13 [1] : vector<8x768xf32> to vector<8xf32>
    %21 = vector.shape_cast %20 : vector<8xf32> to vector<8x1xf32>
    %22 = vector.broadcast %5 : f32 to vector<8x1xf32>
    %23 = arith.addf %21, %22 : vector<8x1xf32>
    %cst_14 = arith.constant 0.000000e+00 : f32
    %24 = vector.broadcast %cst_14 : f32 to vector<8x1xf32>
    %25 = arith.maximumf %23, %24 : vector<8x1xf32>
    %26 = arith.mulf %23, %4 : vector<8x1xf32>
    %27 = arith.subf %25, %26 : vector<8x1xf32>
    %28 = math.absf %23 : vector<8x1xf32>
    %cst_15 = arith.constant 0.000000e+00 : f32
    %29 = vector.broadcast %cst_15 : f32 to vector<8x1xf32>
    %30 = arith.subf %29, %28 : vector<8x1xf32>
    %31 = math.exp %30 : vector<8x1xf32>
    %32 = math.log1p %31 : vector<8x1xf32>
    %33 = arith.addf %27, %32 : vector<8x1xf32>
    %34 = vector.shape_cast %33 : vector<8x1xf32> to vector<1x8x1xf32>
    %cst_16 = arith.constant dense<0.000000e+00> : vector<1xf32>
    %35 = vector.multi_reduction <add>, %34, %cst_16 [1, 2] : vector<1x8x1xf32> to vector<1xf32>
    %36 = vector.shape_cast %35 : vector<1xf32> to vector<1x1x1xf32>
    %37 = vector.extract %36[0, 0, 0] : f32 from vector<1x1x1xf32>
    %cst_17 = arith.constant 8.000000e+00 : f32
    %38 = arith.divf %37, %cst_17 : f32
    %cst_18 = arith.constant 0.000000e+00 : f32
    %39 = vector.broadcast %cst_18 : f32 to vector<8x1xf32>
    %40 = arith.subf %39, %23 : vector<8x1xf32>
    %41 = math.exp %40 : vector<8x1xf32>
    %cst_19 = arith.constant 1.000000e+00 : f32
    %42 = vector.broadcast %cst_19 : f32 to vector<8x1xf32>
    %43 = arith.addf %42, %41 : vector<8x1xf32>
    %44 = tpu.reciprocal %43 {approx = true} : vector<8x1xf32> -> vector<8x1xf32>
    %cst_20 = arith.constant 0.000000e+00 : f32
    %45 = vector.broadcast %cst_20 : f32 to vector<8x1xf32>
    %46 = arith.subf %45, %44 : vector<8x1xf32>
    %47 = tpu.iota {dimensions = array<i32: 1>} : vector<8x128xi32>
    %c0_i32 = arith.constant 0 : i32
    %48 = vector.broadcast %c0_i32 : i32 to vector<8x128xi32>
    %49 = arith.cmpi eq, %47, %48 : vector<8x128xi32>
    %c1_i32 = arith.constant 1 : i32
    %50 = vector.broadcast %c1_i32 : i32 to vector<8x128xi32>
    %51 = arith.cmpi eq, %47, %50 : vector<8x128xi32>
    %c2_i32 = arith.constant 2 : i32
    %52 = vector.broadcast %c2_i32 : i32 to vector<8x128xi32>
    %53 = arith.cmpi eq, %47, %52 : vector<8x128xi32>
    %cst_21 = arith.constant 0.000000e+00 : f32
    %54 = vector.broadcast %38 : f32 to vector<8x128xf32>
    %55 = vector.broadcast %cst_21 : f32 to vector<8x128xf32>
    %56 = arith.select %53, %54, %55 : vector<8x128xi1>, vector<8x128xf32>
    %57 = vector.shape_cast %46 : vector<8x1xf32> to vector<8x1xf32>
    %58 = vector.broadcast %57 : vector<8x1xf32> to vector<8x128xf32>
    %59 = arith.select %51, %58, %56 : vector<8x128xi1>, vector<8x128xf32>
    %60 = vector.shape_cast %23 : vector<8x1xf32> to vector<8x1xf32>
    %61 = vector.broadcast %60 : vector<8x1xf32> to vector<8x128xf32>
    %62 = arith.select %49, %61, %59 : vector<8x128xi1>, vector<8x128xf32>
    %c0_22 = arith.constant 0 : index
    %c0_23 = arith.constant 0 : index
    %63 = vector.load %arg5[%c0_22, %c0_23] : memref<8x128xf32, #tpu.memory_space<vmem>>, vector<8x128xf32>
    tpu.vector_store %arg5[%c0_22, %c0_23], %62 {strides = array<i32>} : memref<8x128xf32, #tpu.memory_space<vmem>>, vector<8x128xf32>,
    return
  }
}

</mosaic_0001>

<llo_original>
// kernel: tpu_custom_call.1
$region0: #{tpu_custom_call.1}
  #allocation0 [shape = 'u32[]', space=smem, size = 0x4, offset = 0x4, fixed_abs, tag = 'smem constant byte address 0x4 - core index']
  #allocation1 [shape = 'u32[144,128]{1,0:T(1,128)}', space=vmem, size = 0x12000, scoped, tag = 'internal scratch']
  #allocation2 [shape = 'f32[1]{0:T(128)S(6)}', space=smem, size = 0x200, scoped, tag = 'scoped memory for tpu_custom_call.1']
  %s0 = inlined_call_operand.hbm [shape: bf16[8,16,768], index: 0, kind: input, shape index: {}]
  %s1 = inlined_call_operand.vmem [shape: f32[8,16,1], index: 1, kind: input, shape index: {}]
  %s2 = inlined_call_operand.vmem [shape: f32[1,768], index: 2, kind: input, shape index: {}]
  %s3 = inlined_call_operand.vmem [shape: f32[8,1], index: 3, kind: input, shape index: {}]
  %s4 = inlined_call_operand.<no memory space> [shape: f32[1], index: 4, kind: input, shape index: {}]
  %s5 = inlined_call_operand.hbm [shape: f32[8,128], index: 5, kind: output, shape index: {}]
  %s6 = sld [smem:[#allocation0]]
  $region34: #{tpu_custom_call.1} parent=0
    _
  %s8 = ssub.s32 1, %s6
  %s9 = scalar_select 0, %s8, %s6
  %10 = sst [smem:[#allocation2]] %s4
  $region1: #{tpu_custom_call.1} parent=0
    #allocation3 [shape = 'u8[196608]{0}', space=vmem, size = 0x30000, scoped, tag = 'input window, operand 0, single buffered']
    #allocation4 [shape = 's32[1]{0}', space=sflag, size = 0x4, scoped, tag = 'scoped memory for tpu_custom_call.1']
    #allocation5 [shape = 's32[1]{0}', space=sflag, size = 0x4, scoped, tag = 'scoped memory for tpu_custom_call.1']
    #allocation6 [shape = 'u8[4096]{0}', space=vmem, size = 0x1000, scoped, tag = 'output window, operand 0, single buffered']
    %11 = vsyncpa [#allocation4], 0
    %12 = vsyncpa [#allocation5], 0
    // Predicated region
    $region2: #{tpu_custom_call.1} parent=1 // pred_check
      _
    $region3: #{tpu_custom_call.1} parent=1 // pred_check_branch
      %14 = sbr.rel (0) target = $region5
    $region4: #{tpu_custom_call.1} parent=1 // pred_region
      %s16 = ssub.s32 6144, 6144
      %17 = vsyncadd [#allocation4], %s16
      %s18 = sshll.u32 [#allocation3], 4
      %s19 = int_to_ptr.vmem [resolvable:$true] %s18
      %24 = dma.hbm_to_vmem [thread:$0]  %s0, 6144, %s19, [#allocation4], 384, 384, 24
    $region5: #{tpu_custom_call.1} parent=1 // pred_fallthru
      _
    // Predicated region
    $region6: #{tpu_custom_call.1} parent=1 // pred_check
      _
    $region7: #{tpu_custom_call.1} parent=1 // pred_check_branch
      %26 = sbr.rel (0) target = $region9
    $region8: #{tpu_custom_call.1} parent=1 // pred_region
      _
    $region9: #{tpu_custom_call.1} parent=1 // pred_fallthru
      _
    // Predicated region
    $region10: #{tpu_custom_call.1} parent=1 // pred_check
      _
    $region11: #{tpu_custom_call.1} parent=1 // pred_check_branch
      %28 = sbr.rel (0) target = $region13
    $region12: #{tpu_custom_call.1} parent=1 // pred_region
      _
    $region13: #{tpu_custom_call.1} parent=1 // pred_fallthru
      _
    // Predicated region
    $region14: #{tpu_custom_call.1} parent=1 // pred_check
      _
    $region15: #{tpu_custom_call.1} parent=1 // pred_check_branch
      %30 = sbr.rel (0) target = $region17
    $region16: #{tpu_custom_call.1} parent=1 // pred_region
      _
    $region17: #{tpu_custom_call.1} parent=1 // pred_fallthru
      _
    // Predicated region
    $region18: #{tpu_custom_call.1} parent=1 // pred_check
      _
    $region19: #{tpu_custom_call.1} parent=1 // pred_check_branch
      %32 = sbr.rel (0) target = $region21
    $region20: #{tpu_custom_call.1} parent=1 // pred_region
      _
    $region21: #{tpu_custom_call.1} parent=1 // pred_fallthru
      _
    // Predicated region
    $region22: #{tpu_custom_call.1} parent=1 // pred_check
      _
    $region23: #{tpu_custom_call.1} parent=1 // pred_check_branch
      %34 = sbr.rel (0) target = $region25
    $region24: #{tpu_custom_call.1} parent=1 // pred_region
      %35 = dma.done [#allocation4], 6144
    $region25: #{tpu_custom_call.1} parent=1 // pred_fallthru
      _
    %v36 = vld [vmem:[#allocation3] sm:$0xff]
    %v37 = vld [vmem:[#allocation3 + $0x8] sm:$0xff]
    %v38 = vld [vmem:[#allocation3 + $0x10] sm:$0xff]
    %v39 = vld [vmem:[#allocation3 + $0x18] sm:$0xff]
    %v40 = vld [vmem:[#allocation3 + $0x20] sm:$0xff]
    %v41 = vld [vmem:[#allocation3 + $0x28] sm:$0xff]
    %v42 = vld [vmem:[#allocation3 + $0x30] sm:$0xff]
    %v43 = vld [vmem:[#allocation3 + $0x38] sm:$0xff]
    %v44 = vld [vmem:[#allocation3 + $0x40] sm:$0xff]
    %v45 = vld [vmem:[#allocation3 + $0x48] sm:$0xff]
    %v46 = vld [vmem:[#allocation3 + $0x50] sm:$0xff]
    %v47 = vld [vmem:[#allocation3 + $0x58] sm:$0xff]
    %v48 = vld [vmem:[#allocation3 + $0x60] sm:$0xff]
    %v49 = vld [vmem:[#allocation3 + $0x68] sm:$0xff]
    %v50 = vld [vmem:[#allocation3 + $0x70] sm:$0xff]
    %v51 = vld [vmem:[#allocation3 + $0x78] sm:$0xff]
    %v52 = vld [vmem:[#allocation3 + $0x80] sm:$0xff]
    %v53 = vld [vmem:[#allocation3 + $0x88] sm:$0xff]
    %v54 = vld [vmem:[#allocation3 + $0x90] sm:$0xff]
    %v55 = vld [vmem:[#allocation3 + $0x98] sm:$0xff]
    %v56 = vld [vmem:[#allocation3 + $0xa0] sm:$0xff]
    %v57 = vld [vmem:[#allocation3 + $0xa8] sm:$0xff]
    %v58 = vld [vmem:[#allocation3 + $0xb0] sm:$0xff]
    %v59 = vld [vmem:[#allocation3 + $0xb8] sm:$0xff]
    %v60 = vld [vmem:[#allocation3 + $0xc0] sm:$0xff]
    %v61 = vld [vmem:[#allocation3 + $0xc8] sm:$0xff]
    %v62 = vld [vmem:[#allocation3 + $0xd0] sm:$0xff]
    %v63 = vld [vmem:[#allocation3 + $0xd8] sm:$0xff]
    %v64 = vld [vmem:[#allocation3 + $0xe0] sm:$0xff]
    %v65 = vld [vmem:[#allocation3 + $0xe8] sm:$0xff]
    %v66 = vld [vmem:[#allocation3 + $0xf0] sm:$0xff]
    %v67 = vld [vmem:[#allocation3 + $0xf8] sm:$0xff]
    %v68 = vld [vmem:[#allocation3 + $0x100] sm:$0xff]
    %v69 = vld [vmem:[#allocation3 + $0x108] sm:$0xff]
    %v70 = vld [vmem:[#allocation3 + $0x110] sm:$0xff]
    %v71 = vld [vmem:[#allocation3 + $0x118] sm:$0xff]
    %v72 = vld [vmem:[#allocation3 + $0x120] sm:$0xff]
    %v73 = vld [vmem:[#allocation3 + $0x128] sm:$0xff]
    %v74 = vld [vmem:[#allocation3 + $0x130] sm:$0xff]
    %v75 = vld [vmem:[#allocation3 + $0x138] sm:$0xff]
    %v76 = vld [vmem:[#allocation3 + $0x140] sm:$0xff]
    %v77 = vld [vmem:[#allocation3 + $0x148] sm:$0xff]
    %v78 = vld [vmem:[#allocation3 + $0x150] sm:$0xff]
    %v79 = vld [vmem:[#allocation3 + $0x158] sm:$0xff]
    %v80 = vld [vmem:[#allocation3 + $0x160] sm:$0xff]
    %v81 = vld [vmem:[#allocation3 + $0x168] sm:$0xff]
    %v82 = vld [vmem:[#allocation3 + $0x170] sm:$0xff]
    %v83 = vld [vmem:[#allocation3 + $0x178] sm:$0xff]
    %v84 = vunpack.c.l.bf16 %v36
    %v85 = vunpack.c.h.bf16 %v36
    %v86 = vunpack.c.l.bf16 %v37
    %v87 = vunpack.c.h.bf16 %v37
    %v88 = vunpack.c.l.bf16 %v38
    %v89 = vunpack.c.h.bf16 %v38
    %v90 = vunpack.c.l.bf16 %v39
    %v91 = vunpack.c.h.bf16 %v39
    %v92 = vunpack.c.l.bf16 %v40
    %v93 = vunpack.c.h.bf16 %v40
    %v94 = vunpack.c.l.bf16 %v41
    %v95 = vunpack.c.h.bf16 %v41
    %v96 = vunpack.c.l.bf16 %v42
    %v97 = vunpack.c.h.bf16 %v42
    %v98 = vunpack.c.l.bf16 %v43
    %v99 = vunpack.c.h.bf16 %v43
    %v100 = vunpack.c.l.bf16 %v44
    %v101 = vunpack.c.h.bf16 %v44
    %v102 = vunpack.c.l.bf16 %v45
    %v103 = vunpack.c.h.bf16 %v45
    %v104 = vunpack.c.l.bf16 %v46
    %v105 = vunpack.c.h.bf16 %v46
    %v106 = vunpack.c.l.bf16 %v47
    %v107 = vunpack.c.h.bf16 %v47
    %v108 = vunpack.c.l.bf16 %v48
    %v109 = vunpack.c.h.bf16 %v48
    %v110 = vunpack.c.l.bf16 %v49
    %v111 = vunpack.c.h.bf16 %v49
    %v112 = vunpack.c.l.bf16 %v50
    %v113 = vunpack.c.h.bf16 %v50
    %v114 = vunpack.c.l.bf16 %v51
    %v115 = vunpack.c.h.bf16 %v51
    %v116 = vunpack.c.l.bf16 %v52
    %v117 = vunpack.c.h.bf16 %v52
    %v118 = vunpack.c.l.bf16 %v53
    %v119 = vunpack.c.h.bf16 %v53
    %v120 = vunpack.c.l.bf16 %v54
    %v121 = vunpack.c.h.bf16 %v54
    %v122 = vunpack.c.l.bf16 %v55
    %v123 = vunpack.c.h.bf16 %v55
    %v124 = vunpack.c.l.bf16 %v56
    %v125 = vunpack.c.h.bf16 %v56
    %v126 = vunpack.c.l.bf16 %v57
    %v127 = vunpack.c.h.bf16 %v57
    %v128 = vunpack.c.l.bf16 %v58
    %v129 = vunpack.c.h.bf16 %v58
    %v130 = vunpack.c.l.bf16 %v59
    %v131 = vunpack.c.h.bf16 %v59
    %v132 = vunpack.c.l.bf16 %v60
    %v133 = vunpack.c.h.bf16 %v60
    %v134 = vunpack.c.l.bf16 %v61
    %v135 = vunpack.c.h.bf16 %v61
    %v136 = vunpack.c.l.bf16 %v62
    %v137 = vunpack.c.h.bf16 %v62
    %v138 = vunpack.c.l.bf16 %v63
    %v139 = vunpack.c.h.bf16 %v63
    %v140 = vunpack.c.l.bf16 %v64
    %v141 = vunpack.c.h.bf16 %v64
    %v142 = vunpack.c.l.bf16 %v65
    %v143 = vunpack.c.h.bf16 %v65
    %v144 = vunpack.c.l.bf16 %v66
    %v145 = vunpack.c.h.bf16 %v66
    %v146 = vunpack.c.l.bf16 %v67
    %v147 = vunpack.c.h.bf16 %v67
    %v148 = vunpack.c.l.bf16 %v68
    %v149 = vunpack.c.h.bf16 %v68
    %v150 = vunpack.c.l.bf16 %v69
    %v151 = vunpack.c.h.bf16 %v69
    %v152 = vunpack.c.l.bf16 %v70
    %v153 = vunpack.c.h.bf16 %v70
    %v154 = vunpack.c.l.bf16 %v71
    %v155 = vunpack.c.h.bf16 %v71
    %v156 = vunpack.c.l.bf16 %v72
    %v157 = vunpack.c.h.bf16 %v72
    %v158 = vunpack.c.l.bf16 %v73
    %v159 = vunpack.c.h.bf16 %v73
    %v160 = vunpack.c.l.bf16 %v74
    %v161 = vunpack.c.h.bf16 %v74
    %v162 = vunpack.c.l.bf16 %v75
    %v163 = vunpack.c.h.bf16 %v75
    %v164 = vunpack.c.l.bf16 %v76
    %v165 = vunpack.c.h.bf16 %v76
    %v166 = vunpack.c.l.bf16 %v77
    %v167 = vunpack.c.h.bf16 %v77
    %v168 = vunpack.c.l.bf16 %v78
    %v169 = vunpack.c.h.bf16 %v78
    %v170 = vunpack.c.l.bf16 %v79
    %v171 = vunpack.c.h.bf16 %v79
    %v172 = vunpack.c.l.bf16 %v80
    %v173 = vunpack.c.h.bf16 %v80
    %v174 = vunpack.c.l.bf16 %v81
    %v175 = vunpack.c.h.bf16 %v81
    %v176 = vunpack.c.l.bf16 %v82
    %v177 = vunpack.c.h.bf16 %v82
    %v178 = vunpack.c.l.bf16 %v83
    %v179 = vunpack.c.h.bf16 %v83
    %v180 = vld [vmem:[%s1] sm:$0xff]
    %v181 = vld [vmem:[%s1 + $0x8] sm:$0xff]
    %v182 = vld [vmem:[%s1 + $0x10] sm:$0xff]
    %v183 = vld [vmem:[%s1 + $0x18] sm:$0xff]
    %v184 = vld [vmem:[%s1 + $0x20] sm:$0xff]
    %v185 = vld [vmem:[%s1 + $0x28] sm:$0xff]
    %v186 = vld [vmem:[%s1 + $0x30] sm:$0xff]
    %v187 = vld [vmem:[%s1 + $0x38] sm:$0xff]
    %v188 = vld [vmem:[%s1 + $0x40] sm:$0xff]
    %v189 = vld [vmem:[%s1 + $0x48] sm:$0xff]
    %v190 = vld [vmem:[%s1 + $0x50] sm:$0xff]
    %v191 = vld [vmem:[%s1 + $0x58] sm:$0xff]
    %v192 = vld [vmem:[%s1 + $0x60] sm:$0xff]
    %v193 = vld [vmem:[%s1 + $0x68] sm:$0xff]
    %v194 = vld [vmem:[%s1 + $0x70] sm:$0xff]
    %v195 = vld [vmem:[%s1 + $0x78] sm:$0xff]
    %v196 = vld [vmem:[%s2] sm:$0x3f]
    %v197 = vld [vmem:[%s3] sm:$0xff]
    %s198 = sld [smem:[#allocation2]]
    %200 = vset.pattern.permute.xlu0 0
    %201 = vperm.xlu0 %200, %v180
    %v202 = vpop.permute.xlu0 %201
    %205 = vset.pattern.permute.xlu0 0
    %206 = vperm.xlu0 %205, %v181
    %v207 = vpop.permute.xlu0 %206
    %210 = vset.pattern.permute.xlu0 0
    %211 = vperm.xlu0 %210, %v182
    %v212 = vpop.permute.xlu0 %211
    %215 = vset.pattern.permute.xlu0 0
    %216 = vperm.xlu0 %215, %v183
    %v217 = vpop.permute.xlu0 %216
    %220 = vset.pattern.permute.xlu0 0
    %221 = vperm.xlu0 %220, %v184
    %v222 = vpop.permute.xlu0 %221
    %225 = vset.pattern.permute.xlu0 0
    %226 = vperm.xlu0 %225, %v185
    %v227 = vpop.permute.xlu0 %226
    %230 = vset.pattern.permute.xlu0 0
    %231 = vperm.xlu0 %230, %v186
    %v232 = vpop.permute.xlu0 %231
    %235 = vset.pattern.permute.xlu0 0
    %236 = vperm.xlu0 %235, %v187
    %v237 = vpop.permute.xlu0 %236
    %240 = vset.pattern.permute.xlu0 0
    %241 = vperm.xlu0 %240, %v188
    %v242 = vpop.permute.xlu0 %241
    %245 = vset.pattern.permute.xlu0 0
    %246 = vperm.xlu0 %245, %v189
    %v247 = vpop.permute.xlu0 %246
    %250 = vset.pattern.permute.xlu0 0
    %251 = vperm.xlu0 %250, %v190
    %v252 = vpop.permute.xlu0 %251
    %255 = vset.pattern.permute.xlu0 0
    %256 = vperm.xlu0 %255, %v191
    %v257 = vpop.permute.xlu0 %256
    %260 = vset.pattern.permute.xlu0 0
    %261 = vperm.xlu0 %260, %v192
    %v262 = vpop.permute.xlu0 %261
    %265 = vset.pattern.permute.xlu0 0
    %266 = vperm.xlu0 %265, %v193
    %v267 = vpop.permute.xlu0 %266
    %270 = vset.pattern.permute.xlu0 0
    %271 = vperm.xlu0 %270, %v194
    %v272 = vpop.permute.xlu0 %271
    %275 = vset.pattern.permute.xlu0 0
    %276 = vperm.xlu0 %275, %v195
    %v277 = vpop.permute.xlu0 %276
    %v279 = vmul.f32 %v84, %v202
    %v280 = vmul.f32 %v85, %v202
    %v281 = vmul.f32 %v86, %v202
    %v282 = vmul.f32 %v87, %v202
    %v283 = vmul.f32 %v88, %v202
    %v284 = vmul.f32 %v89, %v202
    %v285 = vmul.f32 %v90, %v207
    %v286 = vmul.f32 %v91, %v207
    %v287 = vmul.f32 %v92, %v207
    %v288 = vmul.f32 %v93, %v207
    %v289 = vmul.f32 %v94, %v207
    %v290 = vmul.f32 %v95, %v207
    %v291 = vmul.f32 %v96, %v212
    %v292 = vmul.f32 %v97, %v212
    %v293 = vmul.f32 %v98, %v212
    %v294 = vmul.f32 %v99, %v212
    %v295 = vmul.f32 %v100, %v212
    %v296 = vmul.f32 %v101, %v212
    %v297 = vmul.f32 %v102, %v217
    %v298 = vmul.f32 %v103, %v217
    %v299 = vmul.f32 %v104, %v217
    %v300 = vmul.f32 %v105, %v217
    %v301 = vmul.f32 %v106, %v217
    %v302 = vmul.f32 %v107, %v217
    %v303 = vmul.f32 %v108, %v222
    %v304 = vmul.f32 %v109, %v222
    %v305 = vmul.f32 %v110, %v222
    %v306 = vmul.f32 %v111, %v222
    %v307 = vmul.f32 %v112, %v222
    %v308 = vmul.f32 %v113, %v222
    %v309 = vmul.f32 %v114, %v227
    %v310 = vmul.f32 %v115, %v227
    %v311 = vmul.f32 %v116, %v227
    %v312 = vmul.f32 %v117, %v227
    %v313 = vmul.f32 %v118, %v227
    %v314 = vmul.f32 %v119, %v227
    %v315 = vmul.f32 %v120, %v232
    %v316 = vmul.f32 %v121, %v232
    %v317 = vmul.f32 %v122, %v232
    %v318 = vmul.f32 %v123, %v232
    %v319 = vmul.f32 %v124, %v232
    %v320 = vmul.f32 %v125, %v232
    %v321 = vmul.f32 %v126, %v237
    %v322 = vmul.f32 %v127, %v237
    %v323 = vmul.f32 %v128, %v237
    %v324 = vmul.f32 %v129, %v237
    %v325 = vmul.f32 %v130, %v237
    %v326 = vmul.f32 %v131, %v237
    %v327 = vmul.f32 %v132, %v242
    %v328 = vmul.f32 %v133, %v242
    %v329 = vmul.f32 %v134, %v242
    %v330 = vmul.f32 %v135, %v242
    %v331 = vmul.f32 %v136, %v242
    %v332 = vmul.f32 %v137, %v242
    %v333 = vmul.f32 %v138, %v247
    %v334 = vmul.f32 %v139, %v247
    %v335 = vmul.f32 %v140, %v247
    %v336 = vmul.f32 %v141, %v247
    %v337 = vmul.f32 %v142, %v247
    %v338 = vmul.f32 %v143, %v247
    %v339 = vmul.f32 %v144, %v252
    %v340 = vmul.f32 %v145, %v252
    %v341 = vmul.f32 %v146, %v252
    %v342 = vmul.f32 %v147, %v252
    %v343 = vmul.f32 %v148, %v252
    %v344 = vmul.f32 %v149, %v252
    %v345 = vmul.f32 %v150, %v257
    %v346 = vmul.f32 %v151, %v257
    %v347 = vmul.f32 %v152, %v257
    %v348 = vmul.f32 %v153, %v257
    %v349 = vmul.f32 %v154, %v257
    %v350 = vmul.f32 %v155, %v257
    %v351 = vmul.f32 %v156, %v262
    %v352 = vmul.f32 %v157, %v262
    %v353 = vmul.f32 %v158, %v262
    %v354 = vmul.f32 %v159, %v262
    %v355 = vmul.f32 %v160, %v262
    %v356 = vmul.f32 %v161, %v262
    %v357 = vmul.f32 %v162, %v267
    %v358 = vmul.f32 %v163, %v267
    %v359 = vmul.f32 %v164, %v267
    %v360 = vmul.f32 %v165, %v267
    %v361 = vmul.f32 %v166, %v267
    %v362 = vmul.f32 %v167, %v267
    %v363 = vmul.f32 %v168, %v272
    %v364 = vmul.f32 %v169, %v272
    %v365 = vmul.f32 %v170, %v272
    %v366 = vmul.f32 %v171, %v272
    %v367 = vmul.f32 %v172, %v272
    %v368 = vmul.f32 %v173, %v272
    %v369 = vmul.f32 %v174, %v277
    %v370 = vmul.f32 %v175, %v277
    %v371 = vmul.f32 %v176, %v277
    %v372 = vmul.f32 %v177, %v277
    %v373 = vmul.f32 %v178, %v277
    %v374 = vmul.f32 %v179, %v277
    %v375 = vadd.f32 %v279, %v285
    %v376 = vrot.slane %v375, 4
    %v377 = vadd.f32 %v375, %v376
    %v378 = vrot.slane %v377, 2
    %v379 = vadd.f32 %v377, %v378
    %v380 = vrot.slane %v379, 1
    %v381 = vadd.f32 %v379, %v380
    %v382 = vadd.f32 %v280, %v286
    %v383 = vrot.slane %v382, 4
    %v384 = vadd.f32 %v382, %v383
    %v385 = vrot.slane %v384, 2
    %v386 = vadd.f32 %v384, %v385
    %v387 = vrot.slane %v386, 1
    %v388 = vadd.f32 %v386, %v387
    %v389 = vadd.f32 %v281, %v287
    %v390 = vrot.slane %v389, 4
    %v391 = vadd.f32 %v389, %v390
    %v392 = vrot.slane %v391, 2
    %v393 = vadd.f32 %v391, %v392
    %v394 = vrot.slane %v393, 1
    %v395 = vadd.f32 %v393, %v394
    %v396 = vadd.f32 %v282, %v288
    %v397 = vrot.slane %v396, 4
    %v398 = vadd.f32 %v396, %v397
    %v399 = vrot.slane %v398, 2
    %v400 = vadd.f32 %v398, %v399
    %v401 = vrot.slane %v400, 1
    %v402 = vadd.f32 %v400, %v401
    %v403 = vadd.f32 %v283, %v289
    %v404 = vrot.slane %v403, 4
    %v405 = vadd.f32 %v403, %v404
    %v406 = vrot.slane %v405, 2
    %v407 = vadd.f32 %v405, %v406
    %v408 = vrot.slane %v407, 1
    %v409 = vadd.f32 %v407, %v408
    %v410 = vadd.f32 %v284, %v290
    %v411 = vrot.slane %v410, 4
    %v412 = vadd.f32 %v410, %v411
    %v413 = vrot.slane %v412, 2
    %v414 = vadd.f32 %v412, %v413
    %v415 = vrot.slane %v414, 1
    %v416 = vadd.f32 %v414, %v415
    %v417 = vadd.f32 %v291, %v297
    %v418 = vrot.slane %v417, 4
    %v419 = vadd.f32 %v417, %v418
    %v420 = vrot.slane %v419, 2
    %v421 = vadd.f32 %v419, %v420
    %v422 = vrot.slane %v421, 1
    %v423 = vadd.f32 %v421, %v422
    %v424 = vadd.f32 %v292, %v298
    %v425 = vrot.slane %v424, 4
    %v426 = vadd.f32 %v424, %v425
    %v427 = vrot.slane %v426, 2
    %v428 = vadd.f32 %v426, %v427
    %v429 = vrot.slane %v428, 1
    %v430 = vadd.f32 %v428, %v429
    %v431 = vadd.f32 %v293, %v299
    %v432 = vrot.slane %v431, 4
    %v433 = vadd.f32 %v431, %v432
    %v434 = vrot.slane %v433, 2
    %v435 = vadd.f32 %v433, %v434
    %v436 = vrot.slane %v435, 1
    %v437 = vadd.f32 %v435, %v436
    %v438 = vadd.f32 %v294, %v300
    %v439 = vrot.slane %v438, 4
    %v440 = vadd.f32 %v438, %v439
    %v441 = vrot.slane %v440, 2
    %v442 = vadd.f32 %v440, %v441
    %v443 = vrot.slane %v442, 1
    %v444 = vadd.f32 %v442, %v443
    %v445 = vadd.f32 %v295, %v301
    %v446 = vrot.slane %v445, 4
    %v447 = vadd.f32 %v445, %v446
    %v448 = vrot.slane %v447, 2
    %v449 = vadd.f32 %v447, %v448
    %v450 = vrot.slane %v449, 1
    %v451 = vadd.f32 %v449, %v450
    %v452 = vadd.f32 %v296, %v302
    %v453 = vrot.slane %v452, 4
    %v454 = vadd.f32 %v452, %v453
    %v455 = vrot.slane %v454, 2
    %v456 = vadd.f32 %v454, %v455
    %v457 = vrot.slane %v456, 1
    %v458 = vadd.f32 %v456, %v457
    %v459 = vadd.f32 %v303, %v309
    %v460 = vrot.slane %v459, 4
    %v461 = vadd.f32 %v459, %v460
    %v462 = vrot.slane %v461, 2
    %v463 = vadd.f32 %v461, %v462
    %v464 = vrot.slane %v463, 1
    %v465 = vadd.f32 %v463, %v464
    %v466 = vadd.f32 %v304, %v310
    %v467 = vrot.slane %v466, 4
    %v468 = vadd.f32 %v466, %v467
    %v469 = vrot.slane %v468, 2
    %v470 = vadd.f32 %v468, %v469
    %v471 = vrot.slane %v470, 1
    %v472 = vadd.f32 %v470, %v471
    %v473 = vadd.f32 %v305, %v311
    %v474 = vrot.slane %v473, 4
    %v475 = vadd.f32 %v473, %v474
    %v476 = vrot.slane %v475, 2
    %v477 = vadd.f32 %v475, %v476
    %v478 = vrot.slane %v477, 1
    %v479 = vadd.f32 %v477, %v478
    %v480 = vadd.f32 %v306, %v312
    %v481 = vrot.slane %v480, 4
    %v482 = vadd.f32 %v480, %v481
    %v483 = vrot.slane %v482, 2
    %v484 = vadd.f32 %v482, %v483
    %v485 = vrot.slane %v484, 1
    %v486 = vadd.f32 %v484, %v485
    %v487 = vadd.f32 %v307, %v313
    %v488 = vrot.slane %v487, 4
    %v489 = vadd.f32 %v487, %v488
    %v490 = vrot.slane %v489, 2
    %v491 = vadd.f32 %v489, %v490
    %v492 = vrot.slane %v491, 1
    %v493 = vadd.f32 %v491, %v492
    %v494 = vadd.f32 %v308, %v314
    %v495 = vrot.slane %v494, 4
    %v496 = vadd.f32 %v494, %v495
    %v497 = vrot.slane %v496, 2
    %v498 = vadd.f32 %v496, %v497
    %v499 = vrot.slane %v498, 1
    %v500 = vadd.f32 %v498, %v499
    %v501 = vadd.f32 %v315, %v321
    %v502 = vrot.slane %v501, 4
    %v503 = vadd.f32 %v501, %v502
    %v504 = vrot.slane %v503, 2
    %v505 = vadd.f32 %v503, %v504
    %v506 = vrot.slane %v505, 1
    %v507 = vadd.f32 %v505, %v506
    %v508 = vadd.f32 %v316, %v322
    %v509 = vrot.slane %v508, 4
    %v510 = vadd.f32 %v508, %v509
    %v511 = vrot.slane %v510, 2
    %v512 = vadd.f32 %v510, %v511
    %v513 = vrot.slane %v512, 1
    %v514 = vadd.f32 %v512, %v513
    %v515 = vadd.f32 %v317, %v323
    %v516 = vrot.slane %v515, 4
    %v517 = vadd.f32 %v515, %v516
    %v518 = vrot.slane %v517, 2
    %v519 = vadd.f32 %v517, %v518
    %v520 = vrot.slane %v519, 1
    %v521 = vadd.f32 %v519, %v520
    %v522 = vadd.f32 %v318, %v324
    %v523 = vrot.slane %v522, 4
    %v524 = vadd.f32 %v522, %v523
    %v525 = vrot.slane %v524, 2
    %v526 = vadd.f32 %v524, %v525
    %v527 = vrot.slane %v526, 1
    %v528 = vadd.f32 %v526, %v527
    %v529 = vadd.f32 %v319, %v325
    %v530 = vrot.slane %v529, 4
    %v531 = vadd.f32 %v529, %v530
    %v532 = vrot.slane %v531, 2
    %v533 = vadd.f32 %v531, %v532
    %v534 = vrot.slane %v533, 1
    %v535 = vadd.f32 %v533, %v534
    %v536 = vadd.f32 %v320, %v326
    %v537 = vrot.slane %v536, 4
    %v538 = vadd.f32 %v536, %v537
    %v539 = vrot.slane %v538, 2
    %v540 = vadd.f32 %v538, %v539
    %v541 = vrot.slane %v540, 1
    %v542 = vadd.f32 %v540, %v541
    %v543 = vadd.f32 %v327, %v333
    %v544 = vrot.slane %v543, 4
    %v545 = vadd.f32 %v543, %v544
    %v546 = vrot.slane %v545, 2
    %v547 = vadd.f32 %v545, %v546
    %v548 = vrot.slane %v547, 1
    %v549 = vadd.f32 %v547, %v548
    %v550 = vadd.f32 %v328, %v334
    %v551 = vrot.slane %v550, 4
    %v552 = vadd.f32 %v550, %v551
    %v553 = vrot.slane %v552, 2
    %v554 = vadd.f32 %v552, %v553
    %v555 = vrot.slane %v554, 1
    %v556 = vadd.f32 %v554, %v555
    %v557 = vadd.f32 %v329, %v335
    %v558 = vrot.slane %v557, 4
    %v559 = vadd.f32 %v557, %v558
    %v560 = vrot.slane %v559, 2
    %v561 = vadd.f32 %v559, %v560
    %v562 = vrot.slane %v561, 1
    %v563 = vadd.f32 %v561, %v562
    %v564 = vadd.f32 %v330, %v336
    %v565 = vrot.slane %v564, 4
    %v566 = vadd.f32 %v564, %v565
    %v567 = vrot.slane %v566, 2
    %v568 = vadd.f32 %v566, %v567
    %v569 = vrot.slane %v568, 1
    %v570 = vadd.f32 %v568, %v569
    %v571 = vadd.f32 %v331, %v337
    %v572 = vrot.slane %v571, 4
    %v573 = vadd.f32 %v571, %v572
    %v574 = vrot.slane %v573, 2
    %v575 = vadd.f32 %v573, %v574
    %v576 = vrot.slane %v575, 1
    %v577 = vadd.f32 %v575, %v576
    %v578 = vadd.f32 %v332, %v338
    %v579 = vrot.slane %v578, 4
    %v580 = vadd.f32 %v578, %v579
    %v581 = vrot.slane %v580, 2
    %v582 = vadd.f32 %v580, %v581
    %v583 = vrot.slane %v582, 1
    %v584 = vadd.f32 %v582, %v583
    %v585 = vadd.f32 %v339, %v345
    %v586 = vrot.slane %v585, 4
    %v587 = vadd.f32 %v585, %v586
    %v588 = vrot.slane %v587, 2
    %v589 = vadd.f32 %v587, %v588
    %v590 = vrot.slane %v589, 1
    %v591 = vadd.f32 %v589, %v590
    %v592 = vadd.f32 %v340, %v346
    %v593 = vrot.slane %v592, 4
    %v594 = vadd.f32 %v592, %v593
    %v595 = vrot.slane %v594, 2
    %v596 = vadd.f32 %v594, %v595
    %v597 = vrot.slane %v596, 1
    %v598 = vadd.f32 %v596, %v597
    %v599 = vadd.f32 %v341, %v347
    %v600 = vrot.slane %v599, 4
    %v601 = vadd.f32 %v599, %v600
    %v602 = vrot.slane %v601, 2
    %v603 = vadd.f32 %v601, %v602
    %v604 = vrot.slane %v603, 1
    %v605 = vadd.f32 %v603, %v604
    %v606 = vadd.f32 %v342, %v348
    %v607 = vrot.slane %v606, 4
    %v608 = vadd.f32 %v606, %v607
    %v609 = vrot.slane %v608, 2
    %v610 = vadd.f32 %v608, %v609
    %v611 = vrot.slane %v610, 1
    %v612 = vadd.f32 %v610, %v611
    %v613 = vadd.f32 %v343, %v349
    %v614 = vrot.slane %v613, 4
    %v615 = vadd.f32 %v613, %v614
    %v616 = vrot.slane %v615, 2
    %v617 = vadd.f32 %v615, %v616
    %v618 = vrot.slane %v617, 1
    %v619 = vadd.f32 %v617, %v618
    %v620 = vadd.f32 %v344, %v350
    %v621 = vrot.slane %v620, 4
    %v622 = vadd.f32 %v620, %v621
    %v623 = vrot.slane %v622, 2
    %v624 = vadd.f32 %v622, %v623
    %v625 = vrot.slane %v624, 1
    %v626 = vadd.f32 %v624, %v625
    %v627 = vadd.f32 %v351, %v357
    %v628 = vrot.slane %v627, 4
    %v629 = vadd.f32 %v627, %v628
    %v630 = vrot.slane %v629, 2
    %v631 = vadd.f32 %v629, %v630
    %v632 = vrot.slane %v631, 1
    %v633 = vadd.f32 %v631, %v632
    %v634 = vadd.f32 %v352, %v358
    %v635 = vrot.slane %v634, 4
    %v636 = vadd.f32 %v634, %v635
    %v637 = vrot.slane %v636, 2
    %v638 = vadd.f32 %v636, %v637
    %v639 = vrot.slane %v638, 1
    %v640 = vadd.f32 %v638, %v639
    %v641 = vadd.f32 %v353, %v359
    %v642 = vrot.slane %v641, 4
    %v643 = vadd.f32 %v641, %v642
    %v644 = vrot.slane %v643, 2
    %v645 = vadd.f32 %v643, %v644
    %v646 = vrot.slane %v645, 1
    %v647 = vadd.f32 %v645, %v646
    %v648 = vadd.f32 %v354, %v360
    %v649 = vrot.slane %v648, 4
    %v650 = vadd.f32 %v648, %v649
    %v651 = vrot.slane %v650, 2
    %v652 = vadd.f32 %v650, %v651
    %v653 = vrot.slane %v652, 1
    %v654 = vadd.f32 %v652, %v653
    %v655 = vadd.f32 %v355, %v361
    %v656 = vrot.slane %v655, 4
    %v657 = vadd.f32 %v655, %v656
    %v658 = vrot.slane %v657, 2
    %v659 = vadd.f32 %v657, %v658
    %v660 = vrot.slane %v659, 1
    %v661 = vadd.f32 %v659, %v660
    %v662 = vadd.f32 %v356, %v362
    %v663 = vrot.slane %v662, 4
    %v664 = vadd.f32 %v662, %v663
    %v665 = vrot.slane %v664, 2
    %v666 = vadd.f32 %v664, %v665
    %v667 = vrot.slane %v666, 1
    %v668 = vadd.f32 %v666, %v667
    %v669 = vadd.f32 %v363, %v369
    %v670 = vrot.slane %v669, 4
    %v671 = vadd.f32 %v669, %v670
    %v672 = vrot.slane %v671, 2
    %v673 = vadd.f32 %v671, %v672
    %v674 = vrot.slane %v673, 1
    %v675 = vadd.f32 %v673, %v674
    %v676 = vadd.f32 %v364, %v370
    %v677 = vrot.slane %v676, 4
    %v678 = vadd.f32 %v676, %v677
    %v679 = vrot.slane %v678, 2
    %v680 = vadd.f32 %v678, %v679
    %v681 = vrot.slane %v680, 1
    %v682 = vadd.f32 %v680, %v681
    %v683 = vadd.f32 %v365, %v371
    %v684 = vrot.slane %v683, 4
    %v685 = vadd.f32 %v683, %v684
    %v686 = vrot.slane %v685, 2
    %v687 = vadd.f32 %v685, %v686
    %v688 = vrot.slane %v687, 1
    %v689 = vadd.f32 %v687, %v688
    %v690 = vadd.f32 %v366, %v372
    %v691 = vrot.slane %v690, 4
    %v692 = vadd.f32 %v690, %v691
    %v693 = vrot.slane %v692, 2
    %v694 = vadd.f32 %v692, %v693
    %v695 = vrot.slane %v694, 1
    %v696 = vadd.f32 %v694, %v695
    %v697 = vadd.f32 %v367, %v373
    %v698 = vrot.slane %v697, 4
    %v699 = vadd.f32 %v697, %v698
    %v700 = vrot.slane %v699, 2
    %v701 = vadd.f32 %v699, %v700
    %v702 = vrot.slane %v701, 1
    %v703 = vadd.f32 %v701, %v702
    %v704 = vadd.f32 %v368, %v374
    %v705 = vrot.slane %v704, 4
    %v706 = vadd.f32 %v704, %v705
    %v707 = vrot.slane %v706, 2
    %v708 = vadd.f32 %v706, %v707
    %v709 = vrot.slane %v708, 1
    %v710 = vadd.f32 %v708, %v709
    %vm711 = vcmask 7168
    %v712 = vsel %vm711, %v180, 0.0
    %v713 = vsel %vm711, %v181, 0.0
    %v714 = vadd.f32 %v712, %v713
    %v715 = vrot.slane %v714, 4
    %v716 = vadd.f32 %v714, %v715
    %v717 = vrot.slane %v716, 2
    %v718 = vadd.f32 %v716, %v717
    %v719 = vrot.slane %v718, 1
    %v720 = vadd.f32 %v718, %v719
    %v721 = vsel %vm711, %v182, 0.0
    %v722 = vsel %vm711, %v183, 0.0
    %v723 = vadd.f32 %v721, %v722
    %v724 = vrot.slane %v723, 4
    %v725 = vadd.f32 %v723, %v724
    %v726 = vrot.slane %v725, 2
    %v727 = vadd.f32 %v725, %v726
    %v728 = vrot.slane %v727, 1
    %v729 = vadd.f32 %v727, %v728
    %v730 = vsel %vm711, %v184, 0.0
    %v731 = vsel %vm711, %v185, 0.0
    %v732 = vadd.f32 %v730, %v731
    %v733 = vrot.slane %v732, 4
    %v734 = vadd.f32 %v732, %v733
    %v735 = vrot.slane %v734, 2
    %v736 = vadd.f32 %v734, %v735
    %v737 = vrot.slane %v736, 1
    %v738 = vadd.f32 %v736, %v737
    %v739 = vsel %vm711, %v186, 0.0
    %v740 = vsel %vm711, %v187, 0.0
    %v741 = vadd.f32 %v739, %v740
    %v742 = vrot.slane %v741, 4
    %v743 = vadd.f32 %v741, %v742
    %v744 = vrot.slane %v743, 2
    %v745 = vadd.f32 %v743, %v744
    %v746 = vrot.slane %v745, 1
    %v747 = vadd.f32 %v745, %v746
    %v748 = vsel %vm711, %v188, 0.0
    %v749 = vsel %vm711, %v189, 0.0
    %v750 = vadd.f32 %v748, %v749
    %v751 = vrot.slane %v750, 4
    %v752 = vadd.f32 %v750, %v751
    %v753 = vrot.slane %v752, 2
    %v754 = vadd.f32 %v752, %v753
    %v755 = vrot.slane %v754, 1
    %v756 = vadd.f32 %v754, %v755
    %v757 = vsel %vm711, %v190, 0.0
    %v758 = vsel %vm711, %v191, 0.0
    %v759 = vadd.f32 %v757, %v758
    %v760 = vrot.slane %v759, 4
    %v761 = vadd.f32 %v759, %v760
    %v762 = vrot.slane %v761, 2
    %v763 = vadd.f32 %v761, %v762
    %v764 = vrot.slane %v763, 1
    %v765 = vadd.f32 %v763, %v764
    %v766 = vsel %vm711, %v192, 0.0
    %v767 = vsel %vm711, %v193, 0.0
    %v768 = vadd.f32 %v766, %v767
    %v769 = vrot.slane %v768, 4
    %v770 = vadd.f32 %v768, %v769
    %v771 = vrot.slane %v770, 2
    %v772 = vadd.f32 %v770, %v771
    %v773 = vrot.slane %v772, 1
    %v774 = vadd.f32 %v772, %v773
    %v775 = vsel %vm711, %v194, 0.0
    %v776 = vsel %vm711, %v195, 0.0
    %v777 = vadd.f32 %v775, %v776
    %v778 = vrot.slane %v777, 4
    %v779 = vadd.f32 %v777, %v778
    %v780 = vrot.slane %v779, 2
    %v781 = vadd.f32 %v779, %v780
    %v782 = vrot.slane %v781, 1
    %v783 = vadd.f32 %v781, %v782
    %vm784 = vcmp.gt.f32.partialorder %v720, 0.0
    %vm785 = vcmp.gt.f32.partialorder %v729, 0.0
    %vm786 = vcmp.gt.f32.partialorder %v738, 0.0
    %vm787 = vcmp.gt.f32.partialorder %v747, 0.0
    %vm788 = vcmp.gt.f32.partialorder %v756, 0.0
    %vm789 = vcmp.gt.f32.partialorder %v765, 0.0
    %vm790 = vcmp.gt.f32.partialorder %v774, 0.0
    %vm791 = vcmp.gt.f32.partialorder %v783, 0.0
    %793 = vset.pattern.permute.xlu0 0
    %794 = vperm.xlu0 %793, %v720
    %v795 = vpop.permute.xlu0 %794
    %798 = vset.pattern.permute.xlu0 0
    %799 = vperm.xlu0 %798, %v729
    %v800 = vpop.permute.xlu0 %799
    %803 = vset.pattern.permute.xlu0 0
    %804 = vperm.xlu0 %803, %v738
    %v805 = vpop.permute.xlu0 %804
    %808 = vset.pattern.permute.xlu0 0
    %809 = vperm.xlu0 %808, %v747
    %v810 = vpop.permute.xlu0 %809
    %813 = vset.pattern.permute.xlu0 0
    %814 = vperm.xlu0 %813, %v756
    %v815 = vpop.permute.xlu0 %814
    %818 = vset.pattern.permute.xlu0 0
    %819 = vperm.xlu0 %818, %v765
    %v820 = vpop.permute.xlu0 %819
    %823 = vset.pattern.permute.xlu0 0
    %824 = vperm.xlu0 %823, %v774
    %v825 = vpop.permute.xlu0 %824
    %828 = vset.pattern.permute.xlu0 0
    %829 = vperm.xlu0 %828, %v783
    %v830 = vpop.permute.xlu0 %829
    %v832 = vrcp.pop %v795
    %v833 = vmul.f32 %v381, %v832
    %v834 = vmul.f32 %v388, %v832
    %v835 = vmul.f32 %v395, %v832
    %v836 = vmul.f32 %v402, %v832
    %v837 = vmul.f32 %v409, %v832
    %v838 = vmul.f32 %v416, %v832
    %v839 = vrcp.pop %v800
    %v840 = vmul.f32 %v423, %v839
    %v841 = vmul.f32 %v430, %v839
    %v842 = vmul.f32 %v437, %v839
    %v843 = vmul.f32 %v444, %v839
    %v844 = vmul.f32 %v451, %v839
    %v845 = vmul.f32 %v458, %v839
    %v846 = vrcp.pop %v805
    %v847 = vmul.f32 %v465, %v846
    %v848 = vmul.f32 %v472, %v846
    %v849 = vmul.f32 %v479, %v846
    %v850 = vmul.f32 %v486, %v846
    %v851 = vmul.f32 %v493, %v846
    %v852 = vmul.f32 %v500, %v846
    %v853 = vrcp.pop %v810
    %v854 = vmul.f32 %v507, %v853
    %v855 = vmul.f32 %v514, %v853
    %v856 = vmul.f32 %v521, %v853
    %v857 = vmul.f32 %v528, %v853
    %v858 = vmul.f32 %v535, %v853
    %v859 = vmul.f32 %v542, %v853
    %v860 = vrcp.pop %v815
    %v861 = vmul.f32 %v549, %v860
    %v862 = vmul.f32 %v556, %v860
    %v863 = vmul.f32 %v563, %v860
    %v864 = vmul.f32 %v570, %v860
    %v865 = vmul.f32 %v577, %v860
    %v866 = vmul.f32 %v584, %v860
    %v867 = vrcp.pop %v820
    %v868 = vmul.f32 %v591, %v867
    %v869 = vmul.f32 %v598, %v867
    %v870 = vmul.f32 %v605, %v867
    %v871 = vmul.f32 %v612, %v867
    %v872 = vmul.f32 %v619, %v867
    %v873 = vmul.f32 %v626, %v867
    %v874 = vrcp.pop %v825
    %v875 = vmul.f32 %v633, %v874
    %v876 = vmul.f32 %v640, %v874
    %v877 = vmul.f32 %v647, %v874
    %v878 = vmul.f32 %v654, %v874
    %v879 = vmul.f32 %v661, %v874
    %v880 = vmul.f32 %v668, %v874
    %v881 = vrcp.pop %v830
    %v882 = vmul.f32 %v675, %v881
    %v883 = vmul.f32 %v682, %v881
    %v884 = vmul.f32 %v689, %v881
    %v885 = vmul.f32 %v696, %v881
    %v886 = vmul.f32 %v703, %v881
    %v887 = vmul.f32 %v710, %v881
    %v888 = vsel %vm784, 1, 0
    %v889 = vsel %vm785, 1, 0
    %v890 = vsel %vm786, 1, 0
    %v891 = vsel %vm787, 1, 0
    %v892 = vsel %vm788, 1, 0
    %v893 = vsel %vm789, 1, 0
    %v894 = vsel %vm790, 1, 0
    %v895 = vsel %vm791, 1, 0
    %896 = vset.pattern.permute.xlu0 0
    %897 = vperm.xlu0 %896, %v888
    %v898 = vpop.permute.xlu0 %897
    %899 = vset.pattern.permute.xlu0 0
    %900 = vperm.xlu0 %899, %v889
    %v901 = vpop.permute.xlu0 %900
    %902 = vset.pattern.permute.xlu0 0
    %903 = vperm.xlu0 %902, %v890
    %v904 = vpop.permute.xlu0 %903
    %905 = vset.pattern.permute.xlu0 0
    %906 = vperm.xlu0 %905, %v891
    %v907 = vpop.permute.xlu0 %906
    %908 = vset.pattern.permute.xlu0 0
    %909 = vperm.xlu0 %908, %v892
    %v910 = vpop.permute.xlu0 %909
    %911 = vset.pattern.permute.xlu0 0
    %912 = vperm.xlu0 %911, %v893
    %v913 = vpop.permute.xlu0 %912
    %914 = vset.pattern.permute.xlu0 0
    %915 = vperm.xlu0 %914, %v894
    %v916 = vpop.permute.xlu0 %915
    %917 = vset.pattern.permute.xlu0 0
    %918 = vperm.xlu0 %917, %v895
    %v919 = vpop.permute.xlu0 %918
    %vm920 = vcmp.eq.s32.totalorder %v898, 1
    %vm921 = vcmp.eq.s32.totalorder %v901, 1
    %vm922 = vcmp.eq.s32.totalorder %v904, 1
    %vm923 = vcmp.eq.s32.totalorder %v907, 1
    %vm924 = vcmp.eq.s32.totalorder %v910, 1
    %vm925 = vcmp.eq.s32.totalorder %v913, 1
    %vm926 = vcmp.eq.s32.totalorder %v916, 1
    %vm927 = vcmp.eq.s32.totalorder %v919, 1
    %v928 = vsel %vm920, %v833, 0.0
    %v929 = vsel %vm920, %v834, 0.0
    %v930 = vsel %vm920, %v835, 0.0
    %v931 = vsel %vm920, %v836, 0.0
    %v932 = vsel %vm920, %v837, 0.0
    %v933 = vsel %vm920, %v838, 0.0
    %v934 = vsel %vm921, %v840, 0.0
    %v935 = vsel %vm921, %v841, 0.0
    %v936 = vsel %vm921, %v842, 0.0
    %v937 = vsel %vm921, %v843, 0.0
    %v938 = vsel %vm921, %v844, 0.0
    %v939 = vsel %vm921, %v845, 0.0
    %v940 = vsel %vm922, %v847, 0.0
    %v941 = vsel %vm922, %v848, 0.0
    %v942 = vsel %vm922, %v849, 0.0
    %v943 = vsel %vm922, %v850, 0.0
    %v944 = vsel %vm922, %v851, 0.0
    %v945 = vsel %vm922, %v852, 0.0
    %v946 = vsel %vm923, %v854, 0.0
    %v947 = vsel %vm923, %v855, 0.0
    %v948 = vsel %vm923, %v856, 0.0
    %v949 = vsel %vm923, %v857, 0.0
    %v950 = vsel %vm923, %v858, 0.0
    %v951 = vsel %vm923, %v859, 0.0
    %v952 = vsel %vm924, %v861, 0.0
    %v953 = vsel %vm924, %v862, 0.0
    %v954 = vsel %vm924, %v863, 0.0
    %v955 = vsel %vm924, %v864, 0.0
    %v956 = vsel %vm924, %v865, 0.0
    %v957 = vsel %vm924, %v866, 0.0
    %v958 = vsel %vm925, %v868, 0.0
    %v959 = vsel %vm925, %v869, 0.0
    %v960 = vsel %vm925, %v870, 0.0
    %v961 = vsel %vm925, %v871, 0.0
    %v962 = vsel %vm925, %v872, 0.0
    %v963 = vsel %vm925, %v873, 0.0
    %v964 = vsel %vm926, %v875, 0.0
    %v965 = vsel %vm926, %v876, 0.0
    %v966 = vsel %vm926, %v877, 0.0
    %v967 = vsel %vm926, %v878, 0.0
    %v968 = vsel %vm926, %v879, 0.0
    %v969 = vsel %vm926, %v880, 0.0
    %v970 = vsel %vm927, %v882, 0.0
    %v971 = vsel %vm927, %v883, 0.0
    %v972 = vsel %vm927, %v884, 0.0
    %v973 = vsel %vm927, %v885, 0.0
    %v974 = vsel %vm927, %v886, 0.0
    %v975 = vsel %vm927, %v887, 0.0
    %v977 = vlaneseq
    %v978 = vshrl.u32 %v977, 7
    %v979 = vsub.s32 0, %v978
    %v980 = vrot.slane %v196, %v979
    %v981 = vlaneseq
    %v982 = vshrl.u32 %v981, 7
    %v983 = vsub.s32 1, %v982
    %v984 = vrot.slane %v196, %v983
    %v985 = vlaneseq
    %v986 = vshrl.u32 %v985, 7
    %v987 = vsub.s32 2, %v986
    %v988 = vrot.slane %v196, %v987
    %v989 = vlaneseq
    %v990 = vshrl.u32 %v989, 7
    %v991 = vsub.s32 3, %v990
    %v992 = vrot.slane %v196, %v991
    %v993 = vlaneseq
    %v994 = vshrl.u32 %v993, 7
    %v995 = vsub.s32 4, %v994
    %v996 = vrot.slane %v196, %v995
    %v997 = vlaneseq
    %v998 = vshrl.u32 %v997, 7
    %v999 = vsub.s32 5, %v998
    %v1000 = vrot.slane %v196, %v999
    %v1007 = vmul.f32 %v928, %v980
    %v1008 = vmul.f32 %v929, %v984
    %v1009 = vmul.f32 %v930, %v988
    %v1010 = vmul.f32 %v931, %v992
    %v1011 = vmul.f32 %v932, %v996
    %v1012 = vmul.f32 %v933, %v1000
    %v1013 = vmul.f32 %v934, %v980
    %v1014 = vmul.f32 %v935, %v984
    %v1015 = vmul.f32 %v936, %v988
    %v1016 = vmul.f32 %v937, %v992
    %v1017 = vmul.f32 %v938, %v996
    %v1018 = vmul.f32 %v939, %v1000
    %v1019 = vmul.f32 %v940, %v980
    %v1020 = vmul.f32 %v941, %v984
    %v1021 = vmul.f32 %v942, %v988
    %v1022 = vmul.f32 %v943, %v992
    %v1023 = vmul.f32 %v944, %v996
    %v1024 = vmul.f32 %v945, %v1000
    %v1025 = vmul.f32 %v946, %v980
    %v1026 = vmul.f32 %v947, %v984
    %v1027 = vmul.f32 %v948, %v988
    %v1028 = vmul.f32 %v949, %v992
    %v1029 = vmul.f32 %v950, %v996
    %v1030 = vmul.f32 %v951, %v1000
    %v1031 = vmul.f32 %v952, %v980
    %v1032 = vmul.f32 %v953, %v984
    %v1033 = vmul.f32 %v954, %v988
    %v1034 = vmul.f32 %v955, %v992
    %v1035 = vmul.f32 %v956, %v996
    %v1036 = vmul.f32 %v957, %v1000
    %v1037 = vmul.f32 %v958, %v980
    %v1038 = vmul.f32 %v959, %v984
    %v1039 = vmul.f32 %v960, %v988
    %v1040 = vmul.f32 %v961, %v992
    %v1041 = vmul.f32 %v962, %v996
    %v1042 = vmul.f32 %v963, %v1000
    %v1043 = vmul.f32 %v964, %v980
    %v1044 = vmul.f32 %v965, %v984
    %v1045 = vmul.f32 %v966, %v988
    %v1046 = vmul.f32 %v967, %v992
    %v1047 = vmul.f32 %v968, %v996
    %v1048 = vmul.f32 %v969, %v1000
    %v1049 = vmul.f32 %v970, %v980
    %v1050 = vmul.f32 %v971, %v984
    %v1051 = vmul.f32 %v972, %v988
    %v1052 = vmul.f32 %v973, %v992
    %v1053 = vmul.f32 %v974, %v996
    %v1054 = vmul.f32 %v975, %v1000
    %v1103 = vrot.slane %v1013, 7
    %vm1104 = vcmask 1041409
    %v1105 = vsel %vm1104, %v1103, %v1007
    %v1106 = vrot.slane %v1019, 6
    %vm1107 = vcmask 1042434
    %v1108 = vsel %vm1107, %v1106, %v1105
    %v1109 = vrot.slane %v1025, 5
    %vm1110 = vcmask 1043459
    %v1111 = vsel %vm1110, %v1109, %v1108
    %v1112 = vrot.slane %v1031, 4
    %vm1113 = vcmask 1044484
    %v1114 = vsel %vm1113, %v1112, %v1111
    %v1115 = vrot.slane %v1037, 3
    %vm1116 = vcmask 1045509
    %v1117 = vsel %vm1116, %v1115, %v1114
    %v1118 = vrot.slane %v1043, 2
    %vm1119 = vcmask 1046534
    %v1120 = vsel %vm1119, %v1118, %v1117
    %v1121 = vrot.slane %v1049, 1
    %vm1122 = vcmask 1047559
    %v1123 = vsel %vm1122, %v1121, %v1120
    %v1124 = vrot.slane %v1014, 7
    %v1125 = vsel %vm1104, %v1124, %v1008
    %v1126 = vrot.slane %v1020, 6
    %v1127 = vsel %vm1107, %v1126, %v1125
    %v1128 = vrot.slane %v1026, 5
    %v1129 = vsel %vm1110, %v1128, %v1127
    %v1130 = vrot.slane %v1032, 4
    %v1131 = vsel %vm1113, %v1130, %v1129
    %v1132 = vrot.slane %v1038, 3
    %v1133 = vsel %vm1116, %v1132, %v1131
    %v1134 = vrot.slane %v1044, 2
    %v1135 = vsel %vm1119, %v1134, %v1133
    %v1136 = vrot.slane %v1050, 1
    %v1137 = vsel %vm1122, %v1136, %v1135
    %v1138 = vrot.slane %v1015, 7
    %v1139 = vsel %vm1104, %v1138, %v1009
    %v1140 = vrot.slane %v1021, 6
    %v1141 = vsel %vm1107, %v1140, %v1139
    %v1142 = vrot.slane %v1027, 5
    %v1143 = vsel %vm1110, %v1142, %v1141
    %v1144 = vrot.slane %v1033, 4
    %v1145 = vsel %vm1113, %v1144, %v1143
    %v1146 = vrot.slane %v1039, 3
    %v1147 = vsel %vm1116, %v1146, %v1145
    %v1148 = vrot.slane %v1045, 2
    %v1149 = vsel %vm1119, %v1148, %v1147
    %v1150 = vrot.slane %v1051, 1
    %v1151 = vsel %vm1122, %v1150, %v1149
    %v1152 = vrot.slane %v1016, 7
    %v1153 = vsel %vm1104, %v1152, %v1010
    %v1154 = vrot.slane %v1022, 6
    %v1155 = vsel %vm1107, %v1154, %v1153
    %v1156 = vrot.slane %v1028, 5
    %v1157 = vsel %vm1110, %v1156, %v1155
    %v1158 = vrot.slane %v1034, 4
    %v1159 = vsel %vm1113, %v1158, %v1157
    %v1160 = vrot.slane %v1040, 3
    %v1161 = vsel %vm1116, %v1160, %v1159
    %v1162 = vrot.slane %v1046, 2
    %v1163 = vsel %vm1119, %v1162, %v1161
    %v1164 = vrot.slane %v1052, 1
    %v1165 = vsel %vm1122, %v1164, %v1163
    %v1166 = vrot.slane %v1017, 7
    %v1167 = vsel %vm1104, %v1166, %v1011
    %v1168 = vrot.slane %v1023, 6
    %v1169 = vsel %vm1107, %v1168, %v1167
    %v1170 = vrot.slane %v1029, 5
    %v1171 = vsel %vm1110, %v1170, %v1169
    %v1172 = vrot.slane %v1035, 4
    %v1173 = vsel %vm1113, %v1172, %v1171
    %v1174 = vrot.slane %v1041, 3
    %v1175 = vsel %vm1116, %v1174, %v1173
    %v1176 = vrot.slane %v1047, 2
    %v1177 = vsel %vm1119, %v1176, %v1175
    %v1178 = vrot.slane %v1053, 1
    %v1179 = vsel %vm1122, %v1178, %v1177
    %v1180 = vrot.slane %v1018, 7
    %v1181 = vsel %vm1104, %v1180, %v1012
    %v1182 = vrot.slane %v1024, 6
    %v1183 = vsel %vm1107, %v1182, %v1181
    %v1184 = vrot.slane %v1030, 5
    %v1185 = vsel %vm1110, %v1184, %v1183
    %v1186 = vrot.slane %v1036, 4
    %v1187 = vsel %vm1113, %v1186, %v1185
    %v1188 = vrot.slane %v1042, 3
    %v1189 = vsel %vm1116, %v1188, %v1187
    %v1190 = vrot.slane %v1048, 2
    %v1191 = vsel %vm1119, %v1190, %v1189
    %v1192 = vrot.slane %v1054, 1
    %v1193 = vsel %vm1122, %v1192, %v1191
    %v1200 = vadd.f32 %v1123, %v1137
    %v1201 = vadd.f32 %v1200, %v1151
    %v1202 = vadd.f32 %v1201, %v1165
    %v1203 = vadd.f32 %v1202, %v1179
    %v1204 = vadd.f32 %v1203, %v1193
    %1205 = vadd.xlane.f32.xlu0 %v1204
    %v1206 = vpop.xlane.xlu0 %1205
    %v1207 = vstv %s198
    %v1208 = vadd.f32 %v1206, %v1207
    %v1209 = vmax.f32 %v1208, 0.0
    %v1210 = vmul.f32 %v1208, %v197
    %v1211 = vsub.f32 %v1209, %v1210
    %v1212 = vand.u32 2147483647, %v1208
    %v1213 = vsub.f32 0.0, %v1212
    %v1214 = vmul.f32 %v1213, 1.442695
    %v1215 = vpow.pop %v1214
    %v1216 = vadd.f32 %v1215, 1.0
    %v1217 = vlog2.pop %v1216
    %v1218 = vmul.f32 %v1217, 0.6931472
    %v1219 = vmul.f32 -0.5, %v1215
    %v1220 = vadd.f32 %v1219, 1.0
    %v1221 = vmul.f32 %v1220, %v1215
    %v1222 = vand.u32 2147483647, %v1215
    %vm1223 = vcmp.lt.f32.partialorder %v1222, 0.0004427343
    %v1224 = vsel %vm1223, %v1221, %v1218
    %v1225 = vadd.f32 %v1211, %v1224
    %v1226 = vsel %vm711, %v1225, 0.0
    %1227 = vadd.xlane.f32.xlu0 %v1226
    %v1228 = vpop.xlane.xlu0 %1227
    %v1229 = vrot.slane %v1228, 4
    %v1230 = vadd.f32 %v1228, %v1229
    %v1231 = vrot.slane %v1230, 2
    %v1232 = vadd.f32 %v1230, %v1231
    %v1233 = vrot.slane %v1232, 1
    %v1234 = vadd.f32 %v1232, %v1233
    %s1235 = vtos %v1234
    %v1236 = vrcp.pop 8.0
    %s1237 = vtos %v1236
    %s1238 = smul.f32 %s1235, %s1237
    %v1239 = vsub.f32 0.0, %v1208
    %v1240 = vmul.f32 %v1239, 1.442695
    %v1241 = vpow.pop %v1240
    %v1242 = vadd.f32 %v1241, 1.0
    %v1243 = vrcp.pop %v1242
    %v1244 = vsub.f32 0.0, %v1243
    %v1245 = vlaneseq
    %v1246 = vand.u32 %v1245, 127
    %vm1247 = vcmp.eq.s32.totalorder %v1246, 0
    %vm1248 = vcmp.eq.s32.totalorder %v1246, 1
    %vm1249 = vcmp.eq.s32.totalorder %v1246, 2
    %v1250 = vstv %s1238
    %v1251 = vsel %vm1249, %v1250, 0.0
    %v1252 = vsel %vm1248, %v1244, %v1251
    %v1253 = vsel %vm1247, %v1208, %v1252
    %1254 = vst [vmem:[#allocation6] sm:$0xff] %v1253
    // Predicated region
    $region26: #{tpu_custom_call.1} parent=1 // pred_check
      _
    $region27: #{tpu_custom_call.1} parent=1 // pred_check_branch
      %1256 = sbr.rel (0) target = $region29
    $region28: #{tpu_custom_call.1} parent=1 // pred_region
      %s1258 = ssub.s32 128, 128
      %1259 = vsyncadd [#allocation5], %s1258
      %s1261 = sshll.u32 [#allocation6], 4
      %s1262 = int_to_ptr.vmem [resolvable:$true] %s1261
      %1264 = dma.vmem_to_hbm [thread:$0]  %s1262, 128, %s5, [#allocation5]
    $region29: #{tpu_custom_call.1} parent=1 // pred_fallthru
      _
    // Predicated region
    $region30: #{tpu_custom_call.1} parent=1 // pred_check
      _
    $region31: #{tpu_custom_call.1} parent=1 // pred_check_branch
      %1266 = sbr.rel (0) target = $region33
    $region32: #{tpu_custom_call.1} parent=1 // pred_region
      %1267 = dma.done [#allocation5], 128
    $region33: #{tpu_custom_call.1} parent=1 // pred_fallthru
      _
    %1268 = vsyncpa [#allocation4], 1
    %1269 = vsyncpa [#allocation5], 1

</llo_original>
